<compile_context>
chip_gen: v7x
topology: tpu7x:2x2x1
jax: 0.10.0
libtpu: 0.0.40
codegen_flags: <defaults>
</compile_context>

<pallas_src>
import jax
import jax.numpy as jnp
from jax import lax
from jax.experimental import pallas as pl
from jax.experimental.pallas import tpu as pltpu


def _prod_tree(x, axis):
    """Product-reduce `x` over `axis` (kept as size 1) with a log-tree of
    elementwise multiplies. Handles any static extent (odd sizes fold the
    leftover slice back in at the end)."""
    leftover = None
    while x.shape[axis] > 1:
        h = x.shape[axis]
        half = h // 2
        if h % 2 == 1:
            row = lax.slice_in_dim(x, h - 1, h, axis=axis)
            leftover = row if leftover is None else leftover * row
        lo = lax.slice_in_dim(x, 0, half, axis=axis)
        hi = lax.slice_in_dim(x, half, 2 * half, axis=axis)
        x = lo * hi
    if leftover is not None:
        x = x * leftover
    return x  # size-1 along `axis`


def prod_dim2_kernel(x_ref, o_ref):
    """x_ref: [B, C, H, ...] in VMEM;  o_ref: [B, C, 1, ...] in VMEM."""
    o_ref[...] = _prod_tree(x_ref[...], axis=2).astype(o_ref.dtype)


def dendritic_forward(x):
    """Equivalent of Dendritic.forward: torch.prod(x, 2)."""
    assert x.ndim >= 3, "prod over dim 2 requires at least 3 dims"
    kept_shape = x.shape[:2] + (1,) + x.shape[3:]   # dim 2 reduced to size 1
    out_shape = x.shape[:2] + x.shape[3:]           # dim 2 squeezed (torch.prod)

    reduced = pl.pallas_call(
        prod_dim2_kernel,
        out_shape=jax.ShapeDtypeStruct(kept_shape, x.dtype),
        in_specs=[pl.BlockSpec(memory_space=pltpu.MemorySpace.VMEM)],
        out_specs=pl.BlockSpec(memory_space=pltpu.MemorySpace.VMEM),
    )(x)
    # Squeezing a size-1 dim that is not one of the two minor dims of the
    # output is a free reshape (no data movement) outside the kernel.
    return reduced.reshape(out_shape)


if __name__ == "__main__":
    # Small shape consistent with the module: a 4-D activation [B, C, H, W].
    batch, channels, spatial = 2, 4, 16

    key = jax.random.PRNGKey(0)
    # Values in (0.5, 1.5) keep the 16-term product numerically well scaled.
    x = jax.random.uniform(
        key, (batch, channels, spatial, spatial), jnp.float32,
        minval=0.5, maxval=1.5)

    fwd = jax.jit(dendritic_forward)
    out = jax.block_until_ready(fwd(x))

    ref = jnp.prod(x, axis=2)
    assert out.shape == (batch, channels, spatial)
    assert jnp.allclose(out, ref, atol=1e-5, rtol=1e-5), "mismatch vs reference"

    print("KERNEL_OK")
</pallas_src>

<mosaic_0001>
module attributes {stable_mosaic.version = 11 : i64} {
  func.func @prod_dim2_kernel(%arg0: memref<2x4x16x16xf32, #tpu.memory_space<vmem>>, %arg1: memref<2x4x1x16xf32, #tpu.memory_space<vmem>>) attributes {dimension_semantics = [], scalar_prefetch = 0 : i64, scratch_operands = 0 : i64, tpu.core_type = #tpu.core_type<tc>} {
    %c0 = arith.constant 0 : index
    %c0_0 = arith.constant 0 : index
    %c0_1 = arith.constant 0 : index
    %c0_2 = arith.constant 0 : index
    %0 = vector.load %arg0[%c0, %c0_0, %c0_1, %c0_2] : memref<2x4x16x16xf32, #tpu.memory_space<vmem>>, vector<2x4x16x16xf32>
    %1 = vector.extract_strided_slice %0 {offsets = [0, 0, 0, 0], sizes = [2, 4, 8, 16], strides = [1, 1, 1, 1]} : vector<2x4x16x16xf32> to vector<2x4x8x16xf32>
    %2 = vector.extract_strided_slice %0 {offsets = [0, 0, 8, 0], sizes = [2, 4, 8, 16], strides = [1, 1, 1, 1]} : vector<2x4x16x16xf32> to vector<2x4x8x16xf32>
    %3 = arith.mulf %1, %2 : vector<2x4x8x16xf32>
    %4 = vector.extract_strided_slice %3 {offsets = [0, 0, 0, 0], sizes = [2, 4, 4, 16], strides = [1, 1, 1, 1]} : vector<2x4x8x16xf32> to vector<2x4x4x16xf32>
    %5 = vector.extract_strided_slice %3 {offsets = [0, 0, 4, 0], sizes = [2, 4, 4, 16], strides = [1, 1, 1, 1]} : vector<2x4x8x16xf32> to vector<2x4x4x16xf32>
    %6 = arith.mulf %4, %5 : vector<2x4x4x16xf32>
    %7 = vector.extract_strided_slice %6 {offsets = [0, 0, 0, 0], sizes = [2, 4, 2, 16], strides = [1, 1, 1, 1]} : vector<2x4x4x16xf32> to vector<2x4x2x16xf32>
    %8 = vector.extract_strided_slice %6 {offsets = [0, 0, 2, 0], sizes = [2, 4, 2, 16], strides = [1, 1, 1, 1]} : vector<2x4x4x16xf32> to vector<2x4x2x16xf32>
    %9 = arith.mulf %7, %8 : vector<2x4x2x16xf32>
    %10 = vector.extract_strided_slice %9 {offsets = [0, 0, 0, 0], sizes = [2, 4, 1, 16], strides = [1, 1, 1, 1]} : vector<2x4x2x16xf32> to vector<2x4x1x16xf32>
    %11 = vector.extract_strided_slice %9 {offsets = [0, 0, 1, 0], sizes = [2, 4, 1, 16], strides = [1, 1, 1, 1]} : vector<2x4x2x16xf32> to vector<2x4x1x16xf32>
    %12 = arith.mulf %10, %11 : vector<2x4x1x16xf32>
    %c0_3 = arith.constant 0 : index
    %c0_4 = arith.constant 0 : index
    %c0_5 = arith.constant 0 : index
    %c0_6 = arith.constant 0 : index
    %13 = vector.load %arg1[%c0_3, %c0_4, %c0_5, %c0_6] : memref<2x4x1x16xf32, #tpu.memory_space<vmem>>, vector<2x4x1x16xf32>
    tpu.vector_store %arg1[%c0_3, %c0_4, %c0_5, %c0_6], %12 {strides = array<i32>} : memref<2x4x1x16xf32, #tpu.memory_space<vmem>>, vector<2x4x1x16xf32>,
    return
  }
}

</mosaic_0001>

<llo_original>
// kernel: dendritic_forward.1
$region0: #{dendritic_forward.1}
  #allocation0 [shape = 'u32[]', space=smem, size = 0x4, offset = 0x4, fixed_abs, tag = 'smem constant byte address 0x4 - core index']
  #allocation1 [shape = 'u32[144,128]{1,0:T(1,128)}', space=vmem, size = 0x12000, scoped, tag = 'internal scratch']
  %s0 = inlined_call_operand.hbm [shape: f32[2,4,16,16], index: 0, kind: input, shape index: {}]
  %s1 = inlined_call_operand.hbm [shape: f32[2,4,1,16], index: 1, kind: output, shape index: {}]
  %s2 = sld [smem:[#allocation0]]
  $region18: #{dendritic_forward.1} parent=0
    _
  %s4 = ssub.s32 1, %s2
  %s5 = scalar_select 0, %s4, %s2
  $region1: #{dendritic_forward.1} parent=0
    #allocation2 [shape = 'u8[65536]{0}', space=vmem, size = 0x10000, scoped, tag = 'input window, operand 0, single buffered']
    #allocation3 [shape = 's32[1]{0}', space=sflag, size = 0x4, scoped, tag = 'scoped memory for dendritic_forward.1']
    #allocation4 [shape = 's32[1]{0}', space=sflag, size = 0x4, scoped, tag = 'scoped memory for dendritic_forward.1']
    #allocation5 [shape = 'u8[4096]{0}', space=vmem, size = 0x1000, scoped, tag = 'output window, operand 0, single buffered']
    %6 = vsyncpa [#allocation3], 0
    %7 = vsyncpa [#allocation4], 0
    // Predicated region
    $region2: #{dendritic_forward.1} parent=1 // pred_check
      _
    $region3: #{dendritic_forward.1} parent=1 // pred_check_branch
      %9 = sbr.rel (0) target = $region5
    $region4: #{dendritic_forward.1} parent=1 // pred_region
      %s11 = ssub.s32 2048, 2048
      %12 = vsyncadd [#allocation3], %s11
      %s13 = sshll.u32 [#allocation2], 4
      %s14 = int_to_ptr.vmem [resolvable:$true] %s13
      %19 = dma.hbm_to_vmem [thread:$0]  %s0, 2048, %s14, [#allocation3], 128, 128, 8
    $region5: #{dendritic_forward.1} parent=1 // pred_fallthru
      _
    // Predicated region
    $region6: #{dendritic_forward.1} parent=1 // pred_check
      _
    $region7: #{dendritic_forward.1} parent=1 // pred_check_branch
      %21 = sbr.rel (0) target = $region9
    $region8: #{dendritic_forward.1} parent=1 // pred_region
      %22 = dma.done [#allocation3], 2048
    $region9: #{dendritic_forward.1} parent=1 // pred_fallthru
      _
    %v23 = vld [vmem:[#allocation2] sm:$0xff]
    %v24 = vld [vmem:[#allocation2 + $0x8] sm:$0xff]
    %v25 = vld [vmem:[#allocation2 + $0x10] sm:$0xff]
    %v26 = vld [vmem:[#allocation2 + $0x18] sm:$0xff]
    %v27 = vld [vmem:[#allocation2 + $0x20] sm:$0xff]
    %v28 = vld [vmem:[#allocation2 + $0x28] sm:$0xff]
    %v29 = vld [vmem:[#allocation2 + $0x30] sm:$0xff]
    %v30 = vld [vmem:[#allocation2 + $0x38] sm:$0xff]
    %v31 = vld [vmem:[#allocation2 + $0x40] sm:$0xff]
    %v32 = vld [vmem:[#allocation2 + $0x48] sm:$0xff]
    %v33 = vld [vmem:[#allocation2 + $0x50] sm:$0xff]
    %v34 = vld [vmem:[#allocation2 + $0x58] sm:$0xff]
    %v35 = vld [vmem:[#allocation2 + $0x60] sm:$0xff]
    %v36 = vld [vmem:[#allocation2 + $0x68] sm:$0xff]
    %v37 = vld [vmem:[#allocation2 + $0x70] sm:$0xff]
    %v38 = vld [vmem:[#allocation2 + $0x78] sm:$0xff]
    %v39 = vmul.f32 %v23, %v24
    %v40 = vmul.f32 %v25, %v26
    %v41 = vmul.f32 %v27, %v28
    %v42 = vmul.f32 %v29, %v30
    %v43 = vmul.f32 %v31, %v32
    %v44 = vmul.f32 %v33, %v34
    %v45 = vmul.f32 %v35, %v36
    %v46 = vmul.f32 %v37, %v38
    %v55 = vrot.slane %v39, 4
    %v56 = vrot.slane %v40, 4
    %v57 = vrot.slane %v41, 4
    %v58 = vrot.slane %v42, 4
    %v59 = vrot.slane %v43, 4
    %v60 = vrot.slane %v44, 4
    %v61 = vrot.slane %v45, 4
    %v62 = vrot.slane %v46, 4
    %v71 = vmul.f32 %v39, %v55
    %v72 = vmul.f32 %v40, %v56
    %v73 = vmul.f32 %v41, %v57
    %v74 = vmul.f32 %v42, %v58
    %v75 = vmul.f32 %v43, %v59
    %v76 = vmul.f32 %v44, %v60
    %v77 = vmul.f32 %v45, %v61
    %v78 = vmul.f32 %v46, %v62
    %v87 = vrot.slane %v71, 2
    %v88 = vrot.slane %v72, 2
    %v89 = vrot.slane %v73, 2
    %v90 = vrot.slane %v74, 2
    %v91 = vrot.slane %v75, 2
    %v92 = vrot.slane %v76, 2
    %v93 = vrot.slane %v77, 2
    %v94 = vrot.slane %v78, 2
    %v103 = vmul.f32 %v71, %v87
    %v104 = vmul.f32 %v72, %v88
    %v105 = vmul.f32 %v73, %v89
    %v106 = vmul.f32 %v74, %v90
    %v107 = vmul.f32 %v75, %v91
    %v108 = vmul.f32 %v76, %v92
    %v109 = vmul.f32 %v77, %v93
    %v110 = vmul.f32 %v78, %v94
    %v119 = vrot.slane %v103, 1
    %v120 = vrot.slane %v104, 1
    %v121 = vrot.slane %v105, 1
    %v122 = vrot.slane %v106, 1
    %v123 = vrot.slane %v107, 1
    %v124 = vrot.slane %v108, 1
    %v125 = vrot.slane %v109, 1
    %v126 = vrot.slane %v110, 1
    %v135 = vmul.f32 %v103, %v119
    %v136 = vmul.f32 %v104, %v120
    %v137 = vmul.f32 %v105, %v121
    %v138 = vmul.f32 %v106, %v122
    %v139 = vmul.f32 %v107, %v123
    %v140 = vmul.f32 %v108, %v124
    %v141 = vmul.f32 %v109, %v125
    %v142 = vmul.f32 %v110, %v126
    %vm143 = vcmask 122880
    %144 = vst.msk [vmem:[#allocation5] sm:$0x1] %vm143, %v135
    %145 = vst.msk [vmem:[#allocation5 + $0x1] sm:$0x1] %vm143, %v136
    %146 = vst.msk [vmem:[#allocation5 + $0x2] sm:$0x1] %vm143, %v137
    %147 = vst.msk [vmem:[#allocation5 + $0x3] sm:$0x1] %vm143, %v138
    %148 = vst.msk [vmem:[#allocation5 + $0x4] sm:$0x1] %vm143, %v139
    %149 = vst.msk [vmem:[#allocation5 + $0x5] sm:$0x1] %vm143, %v140
    %150 = vst.msk [vmem:[#allocation5 + $0x6] sm:$0x1] %vm143, %v141
    %151 = vst.msk [vmem:[#allocation5 + $0x7] sm:$0x1] %vm143, %v142
    // Predicated region
    $region10: #{dendritic_forward.1} parent=1 // pred_check
      _
    $region11: #{dendritic_forward.1} parent=1 // pred_check_branch
      %153 = sbr.rel (0) target = $region13
    $region12: #{dendritic_forward.1} parent=1 // pred_region
      %s155 = ssub.s32 128, 128
      %156 = vsyncadd [#allocation4], %s155
      %s157 = sshll.u32 [#allocation5], 4
      %s158 = int_to_ptr.vmem [resolvable:$true] %s157
      %163 = dma.vmem_to_hbm [thread:$0]  %s158, 128, %s1, [#allocation4], 16, 16, 1
    $region13: #{dendritic_forward.1} parent=1 // pred_fallthru
      _
    // Predicated region
    $region14: #{dendritic_forward.1} parent=1 // pred_check
      _
    $region15: #{dendritic_forward.1} parent=1 // pred_check_branch
      %165 = sbr.rel (0) target = $region17
    $region16: #{dendritic_forward.1} parent=1 // pred_region
      %166 = dma.done [#allocation4], 128
    $region17: #{dendritic_forward.1} parent=1 // pred_fallthru
      _
    %167 = vsyncpa [#allocation3], 1
    %168 = vsyncpa [#allocation4], 1

</llo_original>
